<compile_context>
chip_gen: v6e
topology: v6e:2x2x1
jax: 0.10.0
libtpu: 0.0.40
codegen_flags: <defaults>
</compile_context>

<pallas_src>
import math
from functools import partial

import jax
import jax.numpy as jnp
from jax import lax
from jax.experimental import pallas as pl
from jax.experimental.pallas import tpu as pltpu

_VMEM_LIMIT = 48 * 1024 * 1024   # > 32 MiB default, < 64 MiB v7x physical


def _pick_tile(dim, preferred, multiple=8):
    """Largest tile <= preferred that divides dim and is a multiple of
    `multiple` (sublane/lane alignment); the full dim if it is already small
    or no aligned divisor exists."""
    if dim <= preferred:
        return dim
    for t in range(preferred, 0, -1):
        if dim % t == 0 and t % multiple == 0:
            return t
    return dim  # TODO(synk): masked ragged tiling for awkward (prime-ish) dims


# ----------------------------------------------------------------------------
# Kernel 1: per-head projection  x @ W + b  ->  (B, Hout, S, D) head layout
# ----------------------------------------------------------------------------
def _proj_heads_kernel(x_ref, w_ref, b_ref, o_ref):
    # x: (1, ts, E)  w: (1, E, D)  b: (1, 1, D)  o: (1, 1, ts, D)
    # Single reduction step (full-E contract) -> no accumulator scratch.
    acc = jnp.dot(x_ref[0], w_ref[0], preferred_element_type=jnp.float32)
    o_ref[0, 0] = (acc + b_ref[0]).astype(o_ref.dtype)


def _project_to_heads(x, w_heads, b_heads, *, ts=256):
    """x: (B, S, E); w_heads: (Hout, E, D); b_heads: (Hout, 1, D) [f32]
    -> (B, Hout, S, D)   (== split_heads(x @ W^T + b).transpose(0, 2, 1, 3)).

    Grid (B, S//ts, Hout) with the head axis innermost: the x block index is
    constant across heads, so the activation is DMA'd once per (b, si) instead
    of once per head."""
    B, S, E = x.shape
    Hout, _, D = w_heads.shape
    ts = _pick_tile(S, ts)
    grid = (B, S // ts, Hout)
    bytes_accessed = int(
        x.size * x.dtype.itemsize
        + B * (S // ts) * Hout * E * D * w_heads.dtype.itemsize
        + b_heads.size * b_heads.dtype.itemsize
        + B * Hout * S * D * x.dtype.itemsize)
    cost = pl.CostEstimate(flops=2 * B * S * E * Hout * D, transcendentals=0,
                           bytes_accessed=bytes_accessed)
    return pl.pallas_call(
        _proj_heads_kernel,
        out_shape=jax.ShapeDtypeStruct((B, Hout, S, D), x.dtype),
        grid_spec=pltpu.PrefetchScalarGridSpec(
            num_scalar_prefetch=0,
            grid=grid,
            in_specs=[
                # activation block: constant across innermost head axis.
                pl.BlockSpec((1, ts, E), lambda b, si, h: (b, si, 0)),
                pl.BlockSpec((1, E, D), lambda b, si, h: (h, 0, 0)),
                pl.BlockSpec((1, 1, D), lambda b, si, h: (h, 0, 0)),
            ],
            out_specs=pl.BlockSpec((1, 1, ts, D),
                                   lambda b, si, h: (b, h, si, 0)),
        ),
        compiler_params=pltpu.CompilerParams(
            dimension_semantics=("parallel", "parallel", "arbitrary"),
            vmem_limit_bytes=_VMEM_LIMIT),
        cost_estimate=cost,
    )(x, w_heads, b_heads)


# ----------------------------------------------------------------------------
# Kernel 2: flash-style attention (online softmax over KV blocks)
# ----------------------------------------------------------------------------
def _flash_kernel(q_ref, k_ref, v_ref, o_ref, m_ref, l_ref, acc_ref):
    kv = pl.program_id(3)

    @pl.when(kv == 0)
    def _():
        m_ref[...] = jnp.full_like(m_ref, -jnp.inf)
        l_ref[...] = jnp.zeros_like(l_ref)
        acc_ref[...] = jnp.zeros_like(acc_ref)

    q = q_ref[0, 0]                     # 1/sqrt(D) already folded into Wq/bq
    k = k_ref[0, 0]
    v = v_ref[0, 0]
    # Contract last dims directly: no explicit transpose of k.
    s = lax.dot_general(q, k, (((1,), (1,)), ((), ())),
                        preferred_element_type=jnp.float32)   # (tq, tkv)

    m_prev = m_ref[...]
    m_new = jnp.maximum(m_prev, jnp.max(s, axis=-1, keepdims=True))
    alpha = jnp.exp(m_prev - m_new)
    p = jnp.exp(s - m_new)
    l_ref[...] = alpha * l_ref[...] + jnp.sum(p, axis=-1, keepdims=True)
    acc_ref[...] = alpha * acc_ref[...] + jnp.dot(
        p.astype(v.dtype), v, preferred_element_type=jnp.float32)
    m_ref[...] = m_new

    @pl.when(kv == pl.num_programs(3) - 1)
    def _():
        o_ref[0, 0] = (acc_ref[...]
                       * pl.reciprocal(l_ref[...], approx=True)
                       ).astype(o_ref.dtype)


def _flash_attention(q, k, v, num_heads, *, q_off=0, k_off=0, v_off=0,
                     tq=512, tkv=1024):
    """q: (B, Hq, S, D), k/v: (B, Hkv, K, D); head offsets allow indexing a
    fused (B, 3H, S, D) / (B, 2H, K, D) tensor without slicing copies.
    Returns (B, H, S, D)."""
    B, _, S, D = q.shape
    K = k.shape[2]
    H = num_heads
    tq = _pick_tile(S, tq)
    tkv = _pick_tile(K, tkv)
    grid = (B, H, S // tq, K // tkv)
    itemsize = q.dtype.itemsize
    cost = pl.CostEstimate(
        flops=4 * B * H * S * K * D,
        transcendentals=2 * B * H * S * K,
        bytes_accessed=(2 * B * H * S * D + 2 * B * H * K * D) * itemsize)
    return pl.pallas_call(
        _flash_kernel,
        out_shape=jax.ShapeDtypeStruct((B, H, S, D), q.dtype),
        grid_spec=pltpu.PrefetchScalarGridSpec(
            num_scalar_prefetch=0,
            grid=grid,
            in_specs=[
                pl.BlockSpec((1, 1, tq, D),
                             lambda b, h, qi, ki: (b, q_off + h, qi, 0)),
                pl.BlockSpec((1, 1, tkv, D),
                             lambda b, h, qi, ki: (b, k_off + h, ki, 0)),
                pl.BlockSpec((1, 1, tkv, D),
                             lambda b, h, qi, ki: (b, v_off + h, ki, 0)),
            ],
            out_specs=pl.BlockSpec((1, 1, tq, D),
                                   lambda b, h, qi, ki: (b, h, qi, 0)),
            scratch_shapes=[pltpu.VMEM((tq, 1), jnp.float32),
                            pltpu.VMEM((tq, 1), jnp.float32),
                            pltpu.VMEM((tq, D), jnp.float32)],
        ),
        compiler_params=pltpu.CompilerParams(
            dimension_semantics=("parallel", "parallel", "parallel",
                                 "arbitrary"),
            vmem_limit_bytes=_VMEM_LIMIT),
        cost_estimate=cost,
    )(q, k, v)


# ----------------------------------------------------------------------------
# Kernel 3: output projection with the head reduction collapsed into the body
# ----------------------------------------------------------------------------
def _out_proj_kernel(x_ref, w_ref, b_ref, o_ref, *, num_heads):
    # x: (1, H, ts, D)  w: (H, D, tn)  b: (1, tn)  o: (1, ts, tn)
    acc = b_ref[...].astype(jnp.float32)          # (1, tn), broadcasts to rows
    for h in range(num_heads):                     # unrolled: H MXU dots/step
        acc = acc + jnp.dot(x_ref[0, h], w_ref[h],
                            preferred_element_type=jnp.float32)
    o_ref[0] = acc.astype(o_ref.dtype)


def _out_projection(attn, wo_heads, bo, *, out_dtype=None, ts=256, tn=512):
    """attn: (B, H, S, D); wo_heads: (H, D, E); bo: (1, E) [f32] -> (B, S, E).
    All heads are contracted inside the body (no H grid axis, no accumulator
    scratch); attn block index is constant across the innermost column axis so
    the attention tensor is read exactly once.  Output stores are tn-wide
    (lane-dense)."""
    B, H, S, D = attn.shape
    E = wo_heads.shape[-1]
    out_dtype = attn.dtype if out_dtype is None else out_dtype
    ts = _pick_tile(S, ts)
    tn = _pick_tile(E, tn, multiple=128)
    grid = (B, S // ts, E // tn)
    bytes_accessed = int(
        attn.size * attn.dtype.itemsize
        + B * (S // ts) * H * D * E * wo_heads.dtype.itemsize
        + bo.size * bo.dtype.itemsize
        + B * S * E * jnp.dtype(out_dtype).itemsize)
    cost = pl.CostEstimate(flops=2 * B * S * H * D * E, transcendentals=0,
                           bytes_accessed=bytes_accessed)
    return pl.pallas_call(
        partial(_out_proj_kernel, num_heads=H),
        out_shape=jax.ShapeDtypeStruct((B, S, E), out_dtype),
        grid_spec=pltpu.PrefetchScalarGridSpec(
            num_scalar_prefetch=0,
            grid=grid,
            in_specs=[
                # attn block constant across innermost ni -> read once.
                pl.BlockSpec((1, H, ts, D), lambda b, si, ni: (b, 0, si, 0)),
                pl.BlockSpec((H, D, tn), lambda b, si, ni: (0, 0, ni)),
                pl.BlockSpec((1, tn), lambda b, si, ni: (0, ni)),
            ],
            out_specs=pl.BlockSpec((1, ts, tn), lambda b, si, ni: (b, si, ni)),
        ),
        compiler_params=pltpu.CompilerParams(
            dimension_semantics=("parallel", "parallel", "arbitrary"),
            vmem_limit_bytes=_VMEM_LIMIT),
        cost_estimate=cost,
    )(attn, wo_heads, bo)


# ----------------------------------------------------------------------------
# One-time weight preparation (pre-transpose / per-head split / fusion / bf16)
# ----------------------------------------------------------------------------
def prepare_params(params, num_heads, compute_dtype=jnp.bfloat16):
    E = params["wq"].shape[0]
    H = num_heads
    D = E // H
    scale = 1.0 / math.sqrt(D)

    def to_heads(w):        # torch (E_out, E_in) -> (H, E_in, D), contract-first
        return w.reshape(H, D, E).transpose(0, 2, 1).astype(compute_dtype)

    def bias_heads(b):      # biases stay f32 (added to f32 accumulators)
        return b.reshape(H, 1, D).astype(jnp.float32)

    # Fold 1/sqrt(head_dim) into the q projection (weights AND bias) so the
    # flash kernel never rescales q.
    wq_h = to_heads(params["wq"] * scale)
    bq_h = bias_heads(params["bq"] * scale)
    wk_h, wv_h = to_heads(params["wk"]), to_heads(params["wv"])
    bk_h, bv_h = bias_heads(params["bk"]), bias_heads(params["bv"])

    return {
        "compute_dtype": compute_dtype,
        "wq_h": wq_h, "bq_h": bq_h,
        "wk_h": wk_h, "bk_h": bk_h,
        "wv_h": wv_h, "bv_h": bv_h,
        # fused QKV (3H "heads") for self-attention fast path
        "wqkv_h": jnp.concatenate([wq_h, wk_h, wv_h], axis=0),   # (3H, E, D)
        "bqkv_h": jnp.concatenate([bq_h, bk_h, bv_h], axis=0),   # (3H, 1, D)
        # fused KV (2H "heads") for the common key-is-value cross-attention
        "wkv_h": jnp.concatenate([wk_h, wv_h], axis=0),          # (2H, E, D)
        "bkv_h": jnp.concatenate([bk_h, bv_h], axis=0),          # (2H, 1, D)
        "wo_h": params["wo"].T.reshape(H, D, E).astype(compute_dtype),
        "bo": params["bo"].reshape(1, E).astype(jnp.float32),
    }


# ----------------------------------------------------------------------------
# Forward pass (eval, no masks) — returns (output, None) like the module
# ----------------------------------------------------------------------------
def multihead_attention(query, key, value, prep, num_heads):
    H = num_heads
    cd = prep["compute_dtype"]
    out_dtype = query.dtype

    self_attn = (query is key) and (key is value)
    kv_fused = (key is value) and not self_attn

    q_in = query.astype(cd)
    if self_attn:
        # One fused QKV projection: activation read once for all 3H heads.
        qkv = _project_to_heads(q_in, prep["wqkv_h"], prep["bqkv_h"])
        attn = _flash_attention(qkv, qkv, qkv, H, q_off=0, k_off=H, v_off=2 * H)
    elif kv_fused:
        # Fused KV projection: key activation read once for 2H heads.
        k_in = key.astype(cd)
        q = _project_to_heads(q_in, prep["wq_h"], prep["bq_h"])
        kv = _project_to_heads(k_in, prep["wkv_h"], prep["bkv_h"])
        attn = _flash_attention(q, kv, kv, H, q_off=0, k_off=0, v_off=H)
    else:
        k_in = key.astype(cd)
        v_in = value.astype(cd)
        q = _project_to_heads(q_in, prep["wq_h"], prep["bq_h"])
        k = _project_to_heads(k_in, prep["wk_h"], prep["bk_h"])
        v = _project_to_heads(v_in, prep["wv_h"], prep["bv_h"])
        attn = _flash_attention(q, k, v, H)

    out = _out_projection(attn, prep["wo_h"], prep["bo"], out_dtype=out_dtype)
    return out, None


# ----------------------------------------------------------------------------
# Deterministic parameter init (torch nn.Linear shapes: W (E, E), b (E,))
# ----------------------------------------------------------------------------
def init_params(key, embed_dim):
    ks = jax.random.split(key, 8)
    bound = 1.0 / math.sqrt(embed_dim)

    def w(k):
        return jax.random.uniform(k, (embed_dim, embed_dim), jnp.float32,
                                  -bound, bound)

    def b(k):
        return jax.random.uniform(k, (embed_dim,), jnp.float32, -bound, bound)

    return {
        "wq": w(ks[0]), "bq": b(ks[1]),
        "wk": w(ks[2]), "bk": b(ks[3]),
        "wv": w(ks[4]), "bv": b(ks[5]),
        "wo": w(ks[6]), "bo": b(ks[7]),
    }


# ----------------------------------------------------------------------------
# Pure-JAX reference
# ----------------------------------------------------------------------------
def _reference(query, key, value, params, num_heads):
    B, S, E = query.shape
    K = key.shape[1]
    H = num_heads
    D = E // H
    q = query @ params["wq"].T + params["bq"]
    k = key @ params["wk"].T + params["bk"]
    v = value @ params["wv"].T + params["bv"]
    q = q.reshape(B, S, H, D).transpose(0, 2, 1, 3)
    k = k.reshape(B, K, H, D).transpose(0, 2, 1, 3)
    v = v.reshape(B, K, H, D).transpose(0, 2, 1, 3)
    s = jnp.einsum("bhsd,bhkd->bhsk", q, k) / math.sqrt(D)
    p = jax.nn.softmax(s, axis=-1)
    o = jnp.einsum("bhsk,bhkd->bhsd", p, v)
    o = o.transpose(0, 2, 1, 3).reshape(B, S, E)
    return o @ params["wo"].T + params["bo"]


if __name__ == "__main__":
    batch, seq_len, embed_dim, num_heads = 2, 8, 32, 4

    root = jax.random.PRNGKey(0)
    k_params, k_q, k_k, k_v = jax.random.split(root, 4)

    params = init_params(k_params, embed_dim)
    query = jax.random.normal(k_q, (batch, seq_len, embed_dim), jnp.float32)
    key = jax.random.normal(k_k, (batch, seq_len, embed_dim), jnp.float32)
    value = jax.random.normal(k_v, (batch, seq_len, embed_dim), jnp.float32)

    ref_general = _reference(query, key, value, params, num_heads)
    ref_self = _reference(query, query, query, params, num_heads)
    ref_kv = _reference(query, key, key, params, num_heads)

    # --- bf16 compute path (default) -------------------------------------
    prep_bf16 = prepare_params(params, num_heads, compute_dtype=jnp.bfloat16)

    out_g, _ = multihead_attention(query, key, value, prep_bf16, num_heads)
    out_g = jax.block_until_ready(out_g)
    assert out_g.shape == (batch, seq_len, embed_dim)
    assert out_g.dtype == query.dtype
    assert jnp.allclose(out_g, ref_general, atol=3e-2, rtol=3e-2), \
        "mismatch (general, bf16)"

    out_s, _ = multihead_attention(query, query, query, prep_bf16, num_heads)
    out_s = jax.block_until_ready(out_s)
    assert jnp.allclose(out_s, ref_self, atol=3e-2, rtol=3e-2), \
        "mismatch (self-attention fused QKV, bf16)"

    # --- f32 compute path (tight numeric check of kernel structure) -------
    prep_f32 = prepare_params(params, num_heads, compute_dtype=jnp.float32)
    out_kv, _ = multihead_attention(query, key, key, prep_f32, num_heads)
    out_kv = jax.block_until_ready(out_kv)
    assert jnp.allclose(out_kv, ref_kv, atol=3e-3, rtol=3e-3), \
        "mismatch (fused KV cross-attention, f32)"

    print("KERNEL_OK")
</pallas_src>

<mosaic_0001>
module attributes {stable_mosaic.version = 11 : i64} {
  func.func @_proj_heads_kernel(%arg0: i32, %arg1: i32, %arg2: i32, %arg3: memref<1x8x32xbf16, #tpu.memory_space<vmem>>, %arg4: memref<1x32x8xbf16, #tpu.memory_space<vmem>>, %arg5: memref<1x1x8xf32, #tpu.memory_space<vmem>>, %arg6: memref<1x1x8x8xbf16, #tpu.memory_space<vmem>>) attributes {dimension_semantics = [#tpu.dimension_semantics<parallel>, #tpu.dimension_semantics<parallel>, #tpu.dimension_semantics<arbitrary>], iteration_bounds = array<i64: 2, 1, 4>, scalar_prefetch = 0 : i64, scratch_operands = 0 : i64, tpu.core_type = #tpu.core_type<tc>, window_params = [{transform_indices = @transform_0, window_bounds = array<i64: 1, 8, 32>}, {transform_indices = @transform_1, window_bounds = array<i64: 1, 32, 8>}, {transform_indices = @transform_2, window_bounds = array<i64: 1, 1, 8>}, {transform_indices = @transform_3, window_bounds = array<i64: 1, 1, 8, 8>}]} {
    %c0 = arith.constant 0 : index
    %c0_0 = arith.constant 0 : index
    %c0_1 = arith.constant 0 : index
    %0 = vector.load %arg3[%c0, %c0_0, %c0_1] : memref<1x8x32xbf16, #tpu.memory_space<vmem>>, vector<1x8x32xbf16>
    %1 = vector.shape_cast %0 : vector<1x8x32xbf16> to vector<8x32xbf16>
    %c0_2 = arith.constant 0 : index
    %c0_3 = arith.constant 0 : index
    %c0_4 = arith.constant 0 : index
    %2 = vector.load %arg4[%c0_2, %c0_3, %c0_4] : memref<1x32x8xbf16, #tpu.memory_space<vmem>>, vector<1x32x8xbf16>
    %3 = vector.shape_cast %2 : vector<1x32x8xbf16> to vector<32x8xbf16>
    %cst = arith.constant dense<0.000000e+00> : vector<8x8xf32>
    %4 = tpu.matmul %1, %3, %cst {dimension_numbers = #tpu.dot_dimension_numbers<[1], [0], [0], [1], [0, 0, 1, 1], [], []>} : vector<8x32xbf16>, vector<32x8xbf16>, vector<8x8xf32> -> vector<8x8xf32>
    %c0_5 = arith.constant 0 : index
    %c0_6 = arith.constant 0 : index
    %c0_7 = arith.constant 0 : index
    %5 = vector.load %arg5[%c0_5, %c0_6, %c0_7] : memref<1x1x8xf32, #tpu.memory_space<vmem>>, vector<1x1x8xf32>
    %6 = vector.shape_cast %5 : vector<1x1x8xf32> to vector<1x8xf32>
    %7 = vector.broadcast %6 : vector<1x8xf32> to vector<8x8xf32>
    %8 = arith.addf %4, %7 : vector<8x8xf32>
    %9 = arith.truncf %8 : vector<8x8xf32> to vector<8x8xbf16>
    %c0_8 = arith.constant 0 : index
    %c0_9 = arith.constant 0 : index
    %c0_10 = arith.constant 0 : index
    %c0_11 = arith.constant 0 : index
    %10 = vector.load %arg6[%c0_8, %c0_9, %c0_10, %c0_11] : memref<1x1x8x8xbf16, #tpu.memory_space<vmem>>, vector<1x1x8x8xbf16>
    %11 = vector.shape_cast %10 : vector<1x1x8x8xbf16> to vector<8x8xbf16>
    %12 = vector.shape_cast %9 : vector<8x8xbf16> to vector<1x1x8x8xbf16>
    tpu.vector_store %arg6[%c0_8, %c0_9, %c0_10, %c0_11], %12 {strides = array<i32>} : memref<1x1x8x8xbf16, #tpu.memory_space<vmem>>, vector<1x1x8x8xbf16>,
    return
  }
  func.func @transform_0(%arg0: i32, %arg1: i32, %arg2: i32) -> (i32, i32, i32) {
    %c0_i32 = arith.constant 0 : i32
    %c0_i32_0 = arith.constant 0 : i32
    return %arg0, %arg1, %c0_i32 : i32, i32, i32
  }
  func.func @transform_1(%arg0: i32, %arg1: i32, %arg2: i32) -> (i32, i32, i32) {
    %c0_i32 = arith.constant 0 : i32
    %c0_i32_0 = arith.constant 0 : i32
    %c0_i32_1 = arith.constant 0 : i32
    return %arg2, %c0_i32, %c0_i32_0 : i32, i32, i32
  }
  func.func @transform_2(%arg0: i32, %arg1: i32, %arg2: i32) -> (i32, i32, i32) {
    %c0_i32 = arith.constant 0 : i32
    %c0_i32_0 = arith.constant 0 : i32
    %c0_i32_1 = arith.constant 0 : i32
    return %arg2, %c0_i32, %c0_i32_0 : i32, i32, i32
  }
  func.func @transform_3(%arg0: i32, %arg1: i32, %arg2: i32) -> (i32, i32, i32, i32) {
    %c0_i32 = arith.constant 0 : i32
    %c0_i32_0 = arith.constant 0 : i32
    return %arg0, %arg2, %arg1, %c0_i32 : i32, i32, i32, i32
  }
}

</mosaic_0001>

<llo_original>
// kernel: tpu_custom_call.1
$region0: #{tpu_custom_call.1}
  #allocation0 [shape = 'u32[]', space=smem, size = 0x4, offset = 0x4, fixed_abs, tag = 'smem constant byte address 0x4 - core index']
  #allocation1 [shape = 'u32[144,128]{1,0:T(1,128)}', space=vmem, size = 0x12000, scoped, tag = 'internal scratch']
  %s0 = inlined_call_operand.vmem [shape: bf16[2,8,32], index: 0, kind: input, shape index: {}]
  %s1 = inlined_call_operand.vmem [shape: bf16[4,32,8], index: 1, kind: input, shape index: {}]
  %s2 = inlined_call_operand.vmem [shape: f32[4,1,8], index: 2, kind: input, shape index: {}]
  %s3 = inlined_call_operand.hbm [shape: bf16[2,4,8,8], index: 3, kind: output, shape index: {}]
  %s4 = sld [smem:[#allocation0]]
  $region45: #{tpu_custom_call.1} parent=0
    _
  %s6 = ssub.s32 1, %s4
  %s7 = scalar_select 0, %s6, %s4
  $region1: #{tpu_custom_call.1} parent=0
    #allocation2 [shape = 'u8[4096]{0}', space=vmem, size = 0x1000, scoped, tag = 'output window, operand 0']
    #allocation3 [shape = 's32[2]{0}', space=sflag, size = 0x8, scoped, tag = 'scoped memory for tpu_custom_call.1']
    %8 = vsyncpa [#allocation3], 0
    %s9 = scalar_lea.sflag [#allocation3], 1
    %10 = vsyncpa %s9, 0
    loop: start=0, step=1, limit=10
    $region2: #{tpu_custom_call.1} parent=1 // loop_pre_header
      _
    $region3: #{tpu_custom_call.1} parent=1 // loop_header
      %s12 = sphi 0, %s16
      %p13 = scmp.ge.s32.totalorder %s12, 10
      %s19 = sphi 0, %s38
      %s20 = sphi 0, %s34
      %s21 = sphi 0, %s30
      %s22 = sphi 0, %s19
      %s23 = sphi 0, %s20
      %s24 = sphi 0, %s21
      %s25 = sphi 0, %s22
      %s26 = sphi 0, %s23
      %s27 = sphi 0, %s24
      %s43 = sphi 0, %s45
      %s46 = sphi 0, %s43
      %s47 = sphi 0, %s46
      %s63 = sphi 0, %s47
      %s69 = sphi 0, %s71
      %s72 = sphi 0, %s69
      %s73 = sphi 0, %s72
      %s89 = sphi 0, %s73
      %s95 = sphi 0, %s97
      %s98 = sphi 0, %s95
      %s99 = sphi 0, %s98
      %s115 = sphi 0, %s99
      %s125 = sphi 0, %s127
      %s128 = sphi 0, %s125
      %s129 = sphi 0, %s128
      %s145 = sphi 0, %s129
    $region4: #{tpu_custom_call.1} parent=1 // loop_header_branch
      %15 = sbr.rel (%p13) target = $region8
    $region5: #{tpu_custom_call.1} parent=1 // loop_body
      %s17 = ssub.s32 %s12, 1
      %s18 = ssub.s32 %s12, 2
      %s28 = sadd.s32 1, %s21
      %p29 = scmp.ge.s32.totalorder %s28, 4
      %s30 = scalar_select %p29, 0, %s28
      %s31 = sadd.s32 1, %s20
      %s32 = scalar_select %p29, %s31, %s20
      %p33 = scmp.ge.s32.totalorder %s32, 1
      %s34 = scalar_select %p33, 0, %s32
      %s35 = sadd.s32 1, %s19
      %s36 = scalar_select %p33, %s35, %s19
      %p37 = scmp.ge.s32.totalorder %s36, 2
      %s38 = scalar_select %p37, 0, %s36
      %s39 = ssub.s32 %s19, %s38
      %s40 = ssub.s32 %s20, %s34
      %s41 = sor.u32 %s39, %s40
      %p42 = scmp.eq.s32.totalorder %s41, 0
      %s44 = sadd.s32 %s43, 1
      %s45 = scalar_select %p42, %s43, %s44
      %p48 = pneg %p42
      %p49 = scmp.eq.s32.totalorder %s12, 7
      %p50 = por %p48, %p49
      %p51 = scmp.ne.s32.totalorder %s43, %s46
      %p52 = scmp.eq.s32.totalorder %s12, 0
      %p53 = por %p51, %p52
      %p54 = scmp.ne.s32.totalorder %s43, %s46
      %p55 = scmp.eq.s32.totalorder %s17, 7
      %p56 = por %p54, %p55
      %p57 = scmp.ne.s32.totalorder %s46, %s47
      %p58 = scmp.eq.s32.totalorder %s17, 0
      %p59 = por %p57, %p58
      %p60 = scmp.ne.s32.totalorder %s46, %s47
      %p61 = scmp.eq.s32.totalorder %s18, 7
      %p62 = por %p60, %p61
      %p64 = scmp.ne.s32.totalorder %s47, %s63
      %p65 = scmp.eq.s32.totalorder %s18, 0
      %p66 = por %p64, %p65
      %s67 = ssub.s32 %s21, %s30
      %p68 = scmp.eq.s32.totalorder %s67, 0
      %s70 = sadd.s32 %s69, 1
      %s71 = scalar_select %p68, %s69, %s70
      %p74 = pneg %p68
      %p75 = scmp.eq.s32.totalorder %s12, 7
      %p76 = por %p74, %p75
      %p77 = scmp.ne.s32.totalorder %s69, %s72
      %p78 = scmp.eq.s32.totalorder %s12, 0
      %p79 = por %p77, %p78
      %p80 = scmp.ne.s32.totalorder %s69, %s72
      %p81 = scmp.eq.s32.totalorder %s17, 7
      %p82 = por %p80, %p81
      %p83 = scmp.ne.s32.totalorder %s72, %s73
      %p84 = scmp.eq.s32.totalorder %s17, 0
      %p85 = por %p83, %p84
      %p86 = scmp.ne.s32.totalorder %s72, %s73
      %p87 = scmp.eq.s32.totalorder %s18, 7
      %p88 = por %p86, %p87
      %p90 = scmp.ne.s32.totalorder %s73, %s89
      %p91 = scmp.eq.s32.totalorder %s18, 0
      %p92 = por %p90, %p91
      %s93 = ssub.s32 %s21, %s30
      %p94 = scmp.eq.s32.totalorder %s93, 0
      %s96 = sadd.s32 %s95, 1
      %s97 = scalar_select %p94, %s95, %s96
      %p100 = pneg %p94
      %p101 = scmp.eq.s32.totalorder %s12, 7
      %p102 = por %p100, %p101
      %p103 = scmp.ne.s32.totalorder %s95, %s98
      %p104 = scmp.eq.s32.totalorder %s12, 0
      %p105 = por %p103, %p104
      %p106 = scmp.ne.s32.totalorder %s95, %s98
      %p107 = scmp.eq.s32.totalorder %s17, 7
      %p108 = por %p106, %p107
      %p109 = scmp.ne.s32.totalorder %s98, %s99
      %p110 = scmp.eq.s32.totalorder %s17, 0
      %p111 = por %p109, %p110
      %p112 = scmp.ne.s32.totalorder %s98, %s99
      %p113 = scmp.eq.s32.totalorder %s18, 7
      %p114 = por %p112, %p113
      %p116 = scmp.ne.s32.totalorder %s99, %s115
      %p117 = scmp.eq.s32.totalorder %s18, 0
      %p118 = por %p116, %p117
      %s119 = ssub.s32 %s19, %s38
      %s120 = ssub.s32 %s21, %s30
      %s121 = sor.u32 %s119, %s120
      %s122 = ssub.s32 %s20, %s34
      %s123 = sor.u32 %s121, %s122
      %p124 = scmp.eq.s32.totalorder %s123, 0
      %s126 = sadd.s32 %s125, 1
      %s127 = scalar_select %p124, %s125, %s126
      %p130 = pneg %p124
      %p131 = scmp.eq.s32.totalorder %s12, 7
      %p132 = por %p130, %p131
      %p133 = scmp.ne.s32.totalorder %s125, %s128
      %p134 = scmp.eq.s32.totalorder %s12, 0
      %p135 = por %p133, %p134
      %p136 = scmp.ne.s32.totalorder %s125, %s128
      %p137 = scmp.eq.s32.totalorder %s17, 7
      %p138 = por %p136, %p137
      %p139 = scmp.ne.s32.totalorder %s128, %s129
      %p140 = scmp.eq.s32.totalorder %s17, 0
      %p141 = por %p139, %p140
      %p142 = scmp.ne.s32.totalorder %s128, %s129
      %p143 = scmp.eq.s32.totalorder %s18, 7
      %p144 = por %p142, %p143
      %p146 = scmp.ne.s32.totalorder %s129, %s145
      %p147 = scmp.eq.s32.totalorder %s18, 0
      %p148 = por %p146, %p147
      %p149 = scmp.le.s32.totalorder 1, %s12
      %p150 = scmp.lt.s32.totalorder %s12, 9
      %p151 = pnand %p149, %p150
      %p152 = pneg %p151
      // Predicated region
      $region9: #{tpu_custom_call.1} parent=5 // pred_check
        _
      $region10: #{tpu_custom_call.1} parent=5 // pred_check_branch
        %154 = sbr.rel (%p151) target = $region12
      $region11: #{tpu_custom_call.1} parent=5 // pred_region
        %s155 = ssub.s32 %s12, 1
      $region12: #{tpu_custom_call.1} parent=5 // pred_fallthru
        _
      %p156 = scmp.lt.s32.totalorder %s12, 8
      // Predicated region
      $region13: #{tpu_custom_call.1} parent=5 // pred_check
        %p157 = pneg %p156
      $region14: #{tpu_custom_call.1} parent=5 // pred_check_branch
        %159 = sbr.rel (%p157) target = $region16
      $region15: #{tpu_custom_call.1} parent=5 // pred_region
        // Predicated region
        $region17: #{tpu_custom_call.1} parent=15 // pred_check
          %p160 = pneg %p53
        $region18: #{tpu_custom_call.1} parent=15 // pred_check_branch
          %162 = sbr.rel (%p160) target = $region20
        $region19: #{tpu_custom_call.1} parent=15 // pred_region
          %p163 = scmp.lt.s32.totalorder %s19, 1
          %s164 = scalar_select %p163, %s19, 1
          %p165 = scmp.lt.s32.totalorder %s20, 0
          %s166 = scalar_select %p165, %s20, 0
          %s167 = sadd.s32 %s166, %s164
          %s168 = smul.addr %s167, 4
          %s169 = scalar_lea.vmem %s0, %s168
        $region20: #{tpu_custom_call.1} parent=15 // pred_fallthru
          _
        // Predicated region
        $region21: #{tpu_custom_call.1} parent=15 // pred_check
          %p170 = pneg %p79
        $region22: #{tpu_custom_call.1} parent=15 // pred_check_branch
          %172 = sbr.rel (%p170) target = $region24
        $region23: #{tpu_custom_call.1} parent=15 // pred_region
          %p173 = scmp.lt.s32.totalorder %s21, 3
          %s174 = scalar_select %p173, %s21, 3
          %s175 = smul.addr %s174, 4
          %s176 = smul.addr %s175, 4
          %s177 = scalar_lea.vmem %s1, %s176
        $region24: #{tpu_custom_call.1} parent=15 // pred_fallthru
          _
        // Predicated region
        $region25: #{tpu_custom_call.1} parent=15 // pred_check
          %p178 = pneg %p105
        $region26: #{tpu_custom_call.1} parent=15 // pred_check_branch
          %180 = sbr.rel (%p178) target = $region28
        $region27: #{tpu_custom_call.1} parent=15 // pred_region
          %p181 = scmp.lt.s32.totalorder %s21, 3
          %s182 = scalar_select %p181, %s21, 3
          %s183 = scalar_lea.vmem %s2, %s182
        $region28: #{tpu_custom_call.1} parent=15 // pred_fallthru
          _
      $region16: #{tpu_custom_call.1} parent=5 // pred_fallthru
        _
      %p184 = scmp.le.s32.totalorder 1, %s12
      %p185 = scmp.lt.s32.totalorder %s12, 9
      %p186 = pnand %p184, %p185
      %p187 = pneg %p186
      // Predicated region
      $region29: #{tpu_custom_call.1} parent=5 // pred_check
        _
      $region30: #{tpu_custom_call.1} parent=5 // pred_check_branch
        %189 = sbr.rel (%p186) target = $region32
      $region31: #{tpu_custom_call.1} parent=5 // pred_region
        %s190 = ssub.s32 %s12, 1
        %p191 = scmp.lt.s32.totalorder %s22, 1
        %s192 = scalar_select %p191, %s22, 1
        %p193 = scmp.lt.s32.totalorder %s23, 0
        %s194 = scalar_select %p193, %s23, 0
        %s195 = sadd.s32 %s194, %s192
        %s196 = smul.addr %s195, 4
        %s197 = scalar_lea.vmem %s0, %s196
        %p198 = pneg %p59
        %p199 = pneg %p56
        %p200 = scmp.lt.s32.totalorder %s24, 3
        %s201 = scalar_select %p200, %s24, 3
        %s202 = smul.addr %s201, 4
        %s203 = smul.addr %s202, 4
        %s204 = scalar_lea.vmem %s1, %s203
        %p205 = pneg %p85
        %p206 = pneg %p82
        %p207 = scmp.lt.s32.totalorder %s24, 3
        %s208 = scalar_select %p207, %s24, 3
        %s209 = scalar_lea.vmem %s2, %s208
        %p210 = pneg %p111
        %p211 = pneg %p108
        %p212 = pneg %p141
        %p213 = pneg %p138
        %s214 = sand.u32 %s128, 1
        %s215 = scalar_lea.sflag [#allocation3], %s214
        %s216 = sand.u32 %s128, 1
        %s217 = smul.addr %s216, 4
        %s218 = scalar_lea.vmem [#allocation2], %s217
        %p219 = scmp.lt.s32.totalorder %s22, 1
        %s220 = scalar_select %p219, %s22, 1
        %p221 = scmp.lt.s32.totalorder %s23, 0
        %s222 = scalar_select %p221, %s23, 0
        %s223 = sadd.s32 %s222, %s220
        %s224 = smul.addr %s223, 4
        %s225 = scalar_lea.vmem %s0, %s224
        %p226 = scmp.lt.s32.totalorder %s24, 3
        %s227 = scalar_select %p226, %s24, 3
        %s228 = smul.addr %s227, 4
        %s229 = smul.addr %s228, 4
        %s230 = scalar_lea.vmem %s1, %s229
        %p231 = scmp.lt.s32.totalorder %s24, 3
        %s232 = scalar_select %p231, %s24, 3
        %s233 = scalar_lea.vmem %s2, %s232
        %v235 = vld [vmem:[%s225] sm:$0xf]
        %v236 = vld [vmem:[%s230] sm:$0xf]
        %v237 = vld [vmem:[%s230 + $0x4] sm:$0xf]
        %v238 = vld [vmem:[%s230 + $0x8] sm:$0xf]
        %v239 = vld [vmem:[%s230 + $0xc] sm:$0xf]
        %v240 = vld [vmem:[%s233] sm:$0x1]
        %v242 = vlaneseq
        %v243 = vshrl.u32 %v242, 7
        %v244 = vsub.s32 0, %v243
        %v245 = vrot.slane %v240, %v244
        %v251 = vunpack.c.l.b16 %v236
        %v252 = vunpack.c.l.b16 %v237
        %v253 = vunpack.c.l.b16 %v238
        %v254 = vunpack.c.l.b16 %v239
        %v255 = vpack.c.b16 %v252, %v251
        %v256 = vpack.c.b16 %v254, %v253
        %vm259 = vcmask 261120
        %v261 = vsel %vm259, %v235, 0
        %263 = vmatprep.subr.bf16.mxu0 0
        %264 = vmatpush1.bf16.msra.mxu0 0
        %265 = vmatprep.subr.bf16.mxu0 0
        %266 = vmatpush1.bf16.msra.mxu0 0
        %267 = vmatprep.subr.bf16.mxu0 0
        %268 = vmatpush1.bf16.msra.mxu0 0
        %269 = vmatprep.subr.bf16.mxu0 0
        %270 = vmatpush1.bf16.msra.mxu0 0
        %271 = vmatprep.subr.bf16.mxu0 0
        %272 = vmatpush1.bf16.msra.mxu0 0
        %273 = vmatprep.subr.bf16.mxu0 0
        %274 = vmatpush1.bf16.msra.mxu0 0
        %275 = vmatprep.subr.bf16.mxu0 0
        %276 = vmatpush1.bf16.msra.mxu0 %v256
        %277 = vmatprep.subr.bf16.mxu0 0
        %278 = vmatpush1.bf16.msra.mxu0 %v255
        %279 = vmatprep.subr.bf16.mxu0 0
        %280 = vmatpush2.bf16.msra.mxu0 0
        %281 = vmatprep.subr.bf16.mxu0 0
        %282 = vmatpush2.bf16.msra.mxu0 0
        %283 = vmatprep.subr.bf16.mxu0 0
        %284 = vmatpush2.bf16.msra.mxu0 0
        %285 = vmatprep.subr.bf16.mxu0 0
        %286 = vmatpush2.bf16.msra.mxu0 0
        %287 = vmatprep.subr.bf16.mxu0 0
        %288 = vmatpush2.bf16.msra.mxu0 0
        %289 = vmatprep.subr.bf16.mxu0 0
        %290 = vmatpush2.bf16.msra.mxu0 0
        %291 = vmatprep.subr.bf16.mxu0 0
        %292 = vmatpush2.bf16.msra.mxu0 0
        %293 = vmatprep.subr.bf16.mxu0 0
        %294 = vmatpush2.bf16.msra.mxu0 0
        %295 = vmatprep.mubr.bf16.mxu0 0
        %296 = vmatmul.mubr.bf16.gmra.mxu0 %v261
        %v297 = vpop.f32.mrf.mxu0
        %v298 = vadd.f32 %v245, %v297
        %v299 = vpop.f32.mrf.mxu0
        %v300 = vpop.f32.mrf.mxu0
        %v301 = vpop.f32.mrf.mxu0
        %302 = vdwg.mxu0
        %v303 = vpack.c.bf16 %v298, %v298
        %vm304 = vcmask 60416
        %305 = vst.msk [vmem:[%s218] sm:$0xf] %vm304, %v303
        %s306 = sand.u32 %s128, 1
        %s307 = scalar_lea.sflag [#allocation3], %s306
        %s308 = sand.u32 %s128, 1
        %s309 = smul.addr %s308, 4
        %s310 = scalar_lea.vmem [#allocation2], %s309
        // Predicated region
        $region33: #{tpu_custom_call.1} parent=31 // pred_check
          %p311 = pneg %p138
        $region34: #{tpu_custom_call.1} parent=31 // pred_check_branch
          %313 = sbr.rel (%p311) target = $region36
        $region35: #{tpu_custom_call.1} parent=31 // pred_region
          %s315 = ssub.s32 64, 64
          %316 = vsyncadd %s307, %s315
          %s317 = sadd.s32 %s23, %s24
          %s318 = smul.addr %s22, 4
          %s319 = sadd.s32 %s317, %s318
          %s320 = smul.addr %s319, 64
          %s321 = scalar_lea.hbm %s3, %s320
          %s323 = sshll.u32 %s310, 4
          %s324 = int_to_ptr.vmem [resolvable:$true] %s323
          %326 = dma.vmem_to_hbm [thread:$0]  %s324, 64, %s321, %s307
        $region36: #{tpu_custom_call.1} parent=31 // pred_fallthru
          _
      $region32: #{tpu_custom_call.1} parent=5 // pred_fallthru
        _
      %p327 = scmp.le.s32.totalorder 2, %s12
      // Predicated region
      $region37: #{tpu_custom_call.1} parent=5 // pred_check
        %p328 = pneg %p327
      $region38: #{tpu_custom_call.1} parent=5 // pred_check_branch
        %330 = sbr.rel (%p328) target = $region40
      $region39: #{tpu_custom_call.1} parent=5 // pred_region
        %s331 = ssub.s32 %s12, 2
        // Predicated region
        $region41: #{tpu_custom_call.1} parent=39 // pred_check
          %p332 = pneg %p144
        $region42: #{tpu_custom_call.1} parent=39 // pred_check_branch
          %334 = sbr.rel (%p332) target = $region44
        $region43: #{tpu_custom_call.1} parent=39 // pred_region
          %s335 = sand.u32 %s129, 1
          %s336 = scalar_lea.sflag [#allocation3], %s335
          %s337 = sand.u32 %s129, 1
          %s338 = smul.addr %s337, 4
          %s339 = scalar_lea.vmem [#allocation2], %s338
          %340 = dma.done %s336, 64
        $region44: #{tpu_custom_call.1} parent=39 // pred_fallthru
          _
      $region40: #{tpu_custom_call.1} parent=5 // pred_fallthru
        _
    $region6: #{tpu_custom_call.1} parent=1 // loop_footer
      %s16 = sadd.s32 1, %s12
    $region7: #{tpu_custom_call.1} parent=1 // loop_footer_branch
      %11 = sbr.rel target = $region3
    $region8: #{tpu_custom_call.1} parent=1 // loop_exit
      _
    %341 = vsyncpa [#allocation3], 1
    %s342 = scalar_lea.sflag [#allocation3], 1
    %343 = vsyncpa %s342, 1

</llo_original>
